<compile_context>
chip_gen: v7x
topology: tpu7x:2x2x1
jax: 0.10.0
libtpu: 0.0.40
codegen_flags: <defaults>
</compile_context>

<pallas_src>
import functools

import jax
import jax.numpy as jnp
from jax import lax
from jax.experimental import pallas as pl
from jax.experimental.pallas import tpu as pltpu


def _variation_kernel(x_ref, mx_ref, my_ref, out_ref, *, W, L, TN, M,
                      need_row_mask, vreg_reduce):
    x = x_ref[...].astype(jnp.float32)                          # (TN, L)

    if need_row_mask:
        # Ragged last tile: out-of-bounds rows hold unspecified HBM data
        # (possibly NaN/Inf) -> must be a select, NOT a multiply-by-0.
        row0 = pl.program_id(0) * TN
        rows = lax.broadcasted_iota(jnp.int32, (TN, 1), 0) + row0
        x = jnp.where(rows < M, x, 0.0)

    # dx[i] = x[i] - x[i+1]; dy[i] = x[i] - x[i+W]  (rolls use the XLU slot).
    dx = x - pltpu.roll(x, shift=L - 1, axis=1)
    dy = x - pltpu.roll(x, shift=L - W, axis=1)

    # Grid-invariant (1, L) masks: 0 where w==W-1 / h==H-1 (these positions
    # are exactly the replication-pad zeros AND the roll wrap-arounds / packed
    # cross-image boundaries), 1 elsewhere.  Broadcast multiplies only.
    var = dx * dx * mx_ref[...] + dy * dy * my_ref[...]         # (TN, L) f32

    if vreg_reduce:
        # Reduce to a single (8,128) vreg with pure VPU adds, using 4
        # independent accumulator chains to hide add latency.
        n_r = TN // 8
        n_acc = min(4, n_r)
        accs = [var[r * 8:(r + 1) * 8, :] for r in range(n_acc)]
        for r in range(n_acc, n_r):
            accs[r % n_acc] = accs[r % n_acc] + var[r * 8:(r + 1) * 8, :]
        acc = accs[0]
        for a in accs[1:]:
            acc = acc + a                                        # (8, L)

        n_c = L // 128
        n_acc_c = min(4, n_c)
        parts = [acc[:, c * 128:(c + 1) * 128] for c in range(n_acc_c)]
        for c in range(n_acc_c, n_c):
            parts[c % n_acc_c] = parts[c % n_acc_c] + acc[:, c * 128:(c + 1) * 128]
        part = parts[0]
        for p in parts[1:]:
            part = part + p                                      # (8, 128)
    else:
        # Awkward shapes (rare): full reduce, parked at [0, 0].
        s = jnp.sum(var)
        ri = lax.broadcasted_iota(jnp.int32, (8, 128), 0)
        ci = lax.broadcasted_iota(jnp.int32, (8, 128), 1)
        part = jnp.where((ri == 0) & (ci == 0), s, jnp.float32(0.0))

    out_ref[...] = part


def _choose_tile(M, rows_budget, pack):
    """Pick TN (rows per tile).  Prefer an exact, sublane-aligned divisor of M
    that fits the budget and yields >= 2 grid steps (v7x has 2 TensorCores)."""
    divs = set()
    i = 1
    while i * i <= M:
        if M % i == 0:
            divs.add(i)
            divs.add(M // i)
        i += 1
    aligned = [d for d in divs
               if d % pack == 0 and d <= rows_budget and M // d >= 2]
    if aligned:
        tn = max(aligned)
        return tn, M // tn, False
    if M <= rows_budget:
        return M, 1, False                       # one full-array tile
    # Ragged fallback: sublane-aligned tile near the budget, row-mask needed.
    tn = max(pack, (rows_budget // pack) * pack)
    return tn, pl.cdiv(M, tn), True


def variation_loss(image, weight=None, mean=False):
    """image: (B, C, H, W). Returns sum (or mean) of dx^2 + dy^2 (float32)."""
    if weight is not None:
        # TODO(synk): per-pixel `weight` branch of VariationLoss.forward is not
        # implemented in the kernel (default path uses weight=None).
        raise NotImplementedError("weight is not supported by the Pallas kernel")

    B, C, H, W = image.shape
    img = H * W
    n_img = B * C
    total_elems = B * C * H * W

    # ---- lane-dense 2-D view: pack k whole channel-images per row ----------
    # TODO(synk): for very large W (>=128, %128==0) a (B*C*H, W) layout with a
    # sublane-shift dy would avoid the long cross-vreg roll; not implemented.
    k = 1
    while img * k < 256 and n_img % (2 * k) == 0 and n_img // (2 * k) >= 2:
        k *= 2
    L = img * k
    M = n_img // k
    x2d = image.reshape(M, L)                    # contiguous -> free reshape

    # ---- grid-invariant column masks (hoisted out of the element path) -----
    cols = jnp.arange(L, dtype=jnp.int32)
    mx = jnp.where(cols % W == W - 1, 0.0, 1.0).astype(jnp.float32).reshape(1, L)
    my = jnp.where((cols % img) >= (H - 1) * W, 0.0,
                   1.0).astype(jnp.float32).reshape(1, L)

    # ---- tile sizing: ~2 MiB input tiles (v7x-safe), larger on v5e/v6e ------
    ELEMS_BUDGET = 512 * 1024                    # ~2 MiB of f32
    VMEM_LIMIT = 32 * 1024 * 1024
    try:
        info = pltpu.get_tpu_info()
        if getattr(info, "vmem_capacity_bytes", 0) >= 100 * 1024 * 1024:
            # v5e / v6e (128 MiB physical VMEM): amortize per-step overhead.
            ELEMS_BUDGET = 1024 * 1024           # ~4 MiB
            VMEM_LIMIT = 64 * 1024 * 1024
    except Exception:
        pass

    pack = {4: 8, 2: 16, 1: 32}.get(jnp.dtype(image.dtype).itemsize, 8)
    rows_budget = min(4096, max(1, ELEMS_BUDGET // L))
    TN, num_tiles, need_row_mask = _choose_tile(M, rows_budget, pack)

    vreg_reduce = (TN % 8 == 0) and (L % 128 == 0)

    kernel = functools.partial(
        _variation_kernel, W=W, L=L, TN=TN, M=M,
        need_row_mask=need_row_mask, vreg_reduce=vreg_reduce)

    out_partials = pl.pallas_call(
        kernel,
        out_shape=jax.ShapeDtypeStruct((num_tiles * 8, 128), jnp.float32),
        grid_spec=pltpu.PrefetchScalarGridSpec(
            num_scalar_prefetch=0,
            grid=(num_tiles,),
            in_specs=[
                pl.BlockSpec((TN, L), lambda t: (t, 0)),
                pl.BlockSpec((1, L), lambda t: (0, 0)),   # mx: VMEM-resident
                pl.BlockSpec((1, L), lambda t: (0, 0)),   # my: VMEM-resident
            ],
            out_specs=pl.BlockSpec((8, 128), lambda t: (t, 0)),
        ),
        compiler_params=pltpu.CompilerParams(
            dimension_semantics=("parallel",),            # no cross-step state
            vmem_limit_bytes=VMEM_LIMIT,
        ),
        cost_estimate=pl.CostEstimate(
            flops=7 * total_elems,
            transcendentals=0,
            bytes_accessed=total_elems * jnp.dtype(image.dtype).itemsize
            + 2 * L * 4 + num_tiles * 8 * 128 * 4,
        ),
    )(x2d, mx, my)

    total = jnp.sum(out_partials)                         # tiny final reduce
    if mean:
        return total / jnp.float32(total_elems)
    return total


def _reference(image, mean=False):
    """Pure-JAX reference matching the PyTorch module (weight=None)."""
    x = image.astype(jnp.float32)
    xp = jnp.pad(x, ((0, 0), (0, 0), (0, 1), (0, 1)), mode="edge")
    dx = xp[:, :, :-1, :-1] - xp[:, :, :-1, 1:]
    dy = xp[:, :, :-1, :-1] - xp[:, :, 1:, :-1]
    var = dx ** 2 + dy ** 2
    return var.mean() if mean else var.sum()


if __name__ == "__main__":
    key = jax.random.PRNGKey(0)
    B, C, H, W = 2, 4, 16, 16
    image = jax.random.normal(key, (B, C, H, W), dtype=jnp.float32)

    out = variation_loss(image, mean=False)
    out = jax.block_until_ready(out)

    ref = _reference(image, mean=False)
    assert jnp.allclose(out, ref, rtol=1e-5, atol=1e-5), (out, ref)

    # also exercise the mean path once
    out_mean = jax.block_until_ready(variation_loss(image, mean=True))
    ref_mean = _reference(image, mean=True)
    assert jnp.allclose(out_mean, ref_mean, rtol=1e-5, atol=1e-5), (out_mean, ref_mean)

    print("KERNEL_OK")
</pallas_src>

<mosaic_0001>
module attributes {stable_mosaic.version = 11 : i64} {
  func.func @_variation_kernel(%arg0: i32, %arg1: memref<8x256xf32, #tpu.memory_space<vmem>>, %arg2: memref<1x256xf32, #tpu.memory_space<vmem>>, %arg3: memref<1x256xf32, #tpu.memory_space<vmem>>, %arg4: memref<8x128xf32, #tpu.memory_space<vmem>>) attributes {dimension_semantics = [#tpu.dimension_semantics<parallel>], iteration_bounds = array<i64: 1>, scalar_prefetch = 0 : i64, scratch_operands = 0 : i64, tpu.core_type = #tpu.core_type<tc>, window_params = [{transform_indices = @transform_0, window_bounds = array<i64: 8, 256>}, {pipeline_mode = #tpu.pipeline_mode<synchronous>, transform_indices = @transform_1, window_bounds = array<i64: 1, 256>}, {pipeline_mode = #tpu.pipeline_mode<synchronous>, transform_indices = @transform_2, window_bounds = array<i64: 1, 256>}, {transform_indices = @transform_3, window_bounds = array<i64: 8, 128>}]} {
    %c0 = arith.constant 0 : index
    %c0_0 = arith.constant 0 : index
    %0 = vector.load %arg1[%c0, %c0_0] : memref<8x256xf32, #tpu.memory_space<vmem>>, vector<8x256xf32>
    %c255_i32 = arith.constant 255 : i32
    %1 = tpu.dynamic_rotate %0 by %c255_i32 dim 1 : vector<8x256xf32>, i32 -> vector<8x256xf32>
    %2 = arith.subf %0, %1 : vector<8x256xf32>
    %c240_i32 = arith.constant 240 : i32
    %3 = tpu.dynamic_rotate %0 by %c240_i32 dim 1 : vector<8x256xf32>, i32 -> vector<8x256xf32>
    %4 = arith.subf %0, %3 : vector<8x256xf32>
    %5 = arith.mulf %2, %2 : vector<8x256xf32>
    %c0_1 = arith.constant 0 : index
    %c0_2 = arith.constant 0 : index
    %6 = vector.load %arg2[%c0_1, %c0_2] : memref<1x256xf32, #tpu.memory_space<vmem>>, vector<1x256xf32>
    %7 = vector.broadcast %6 : vector<1x256xf32> to vector<8x256xf32>
    %8 = arith.mulf %5, %7 : vector<8x256xf32>
    %9 = arith.mulf %4, %4 : vector<8x256xf32>
    %c0_3 = arith.constant 0 : index
    %c0_4 = arith.constant 0 : index
    %10 = vector.load %arg3[%c0_3, %c0_4] : memref<1x256xf32, #tpu.memory_space<vmem>>, vector<1x256xf32>
    %11 = vector.broadcast %10 : vector<1x256xf32> to vector<8x256xf32>
    %12 = arith.mulf %9, %11 : vector<8x256xf32>
    %13 = arith.addf %8, %12 : vector<8x256xf32>
    %14 = vector.extract_strided_slice %13 {offsets = [0, 0], sizes = [8, 128], strides = [1, 1]} : vector<8x256xf32> to vector<8x128xf32>
    %15 = vector.extract_strided_slice %13 {offsets = [0, 128], sizes = [8, 128], strides = [1, 1]} : vector<8x256xf32> to vector<8x128xf32>
    %16 = arith.addf %14, %15 : vector<8x128xf32>
    %c0_5 = arith.constant 0 : index
    %c0_6 = arith.constant 0 : index
    %17 = vector.load %arg4[%c0_5, %c0_6] : memref<8x128xf32, #tpu.memory_space<vmem>>, vector<8x128xf32>
    tpu.vector_store %arg4[%c0_5, %c0_6], %16 {strides = array<i32>} : memref<8x128xf32, #tpu.memory_space<vmem>>, vector<8x128xf32>,
    return
  }
  func.func @transform_0(%arg0: i32) -> (i32, i32) {
    %c0_i32 = arith.constant 0 : i32
    %c0_i32_0 = arith.constant 0 : i32
    return %arg0, %c0_i32 : i32, i32
  }
  func.func @transform_1(%arg0: i32) -> (i32, i32) {
    %c0_i32 = arith.constant 0 : i32
    %c0_i32_0 = arith.constant 0 : i32
    %c0_i32_1 = arith.constant 0 : i32
    return %c0_i32, %c0_i32_0 : i32, i32
  }
  func.func @transform_2(%arg0: i32) -> (i32, i32) {
    %c0_i32 = arith.constant 0 : i32
    %c0_i32_0 = arith.constant 0 : i32
    %c0_i32_1 = arith.constant 0 : i32
    return %c0_i32, %c0_i32_0 : i32, i32
  }
  func.func @transform_3(%arg0: i32) -> (i32, i32) {
    %c0_i32 = arith.constant 0 : i32
    %c0_i32_0 = arith.constant 0 : i32
    return %arg0, %c0_i32 : i32, i32
  }
}

</mosaic_0001>

<llo_original>
// kernel: tpu_custom_call.1
$region0: #{tpu_custom_call.1}
  #allocation0 [shape = 'u32[]', space=smem, size = 0x4, offset = 0x4, fixed_abs, tag = 'smem constant byte address 0x4 - core index']
  #allocation1 [shape = 'u32[144,128]{1,0:T(1,128)}', space=vmem, size = 0x12000, scoped, tag = 'internal scratch']
  %s0 = inlined_call_operand.hbm [shape: f32[8,256], index: 0, kind: input, shape index: {}]
  %s1 = inlined_call_operand.vmem [shape: f32[1,256], index: 1, kind: input, shape index: {}]
  %s2 = inlined_call_operand.vmem [shape: f32[1,256], index: 2, kind: input, shape index: {}]
  %s3 = inlined_call_operand.hbm [shape: f32[8,128], index: 3, kind: output, shape index: {}]
  %s4 = sld [smem:[#allocation0]]
  $region26: #{tpu_custom_call.1} parent=0
    _
  %s6 = ssub.s32 1, %s4
  %s7 = scalar_select 0, %s6, %s4
  $region1: #{tpu_custom_call.1} parent=0
    #allocation2 [shape = 'u8[8192]{0}', space=vmem, size = 0x2000, scoped, tag = 'input window, operand 0, single buffered']
    #allocation3 [shape = 's32[1]{0}', space=sflag, size = 0x4, scoped, tag = 'scoped memory for tpu_custom_call.1']
    #allocation4 [shape = 's32[1]{0}', space=sflag, size = 0x4, scoped, tag = 'scoped memory for tpu_custom_call.1']
    #allocation5 [shape = 'u8[4096]{0}', space=vmem, size = 0x1000, scoped, tag = 'output window, operand 0, single buffered']
    %8 = vsyncpa [#allocation3], 0
    %9 = vsyncpa [#allocation4], 0
    // Predicated region
    $region2: #{tpu_custom_call.1} parent=1 // pred_check
      _
    $region3: #{tpu_custom_call.1} parent=1 // pred_check_branch
      %11 = sbr.rel (0) target = $region5
    $region4: #{tpu_custom_call.1} parent=1 // pred_region
      %s13 = ssub.s32 256, 256
      %14 = vsyncadd [#allocation3], %s13
      %s16 = sshll.u32 [#allocation2], 4
      %s17 = int_to_ptr.vmem [resolvable:$true] %s16
      %19 = dma.hbm_to_vmem [thread:$0]  %s0, 256, %s17, [#allocation3]
    $region5: #{tpu_custom_call.1} parent=1 // pred_fallthru
      _
    // Predicated region
    $region6: #{tpu_custom_call.1} parent=1 // pred_check
      _
    $region7: #{tpu_custom_call.1} parent=1 // pred_check_branch
      %21 = sbr.rel (0) target = $region9
    $region8: #{tpu_custom_call.1} parent=1 // pred_region
      _
    $region9: #{tpu_custom_call.1} parent=1 // pred_fallthru
      _
    // Predicated region
    $region10: #{tpu_custom_call.1} parent=1 // pred_check
      _
    $region11: #{tpu_custom_call.1} parent=1 // pred_check_branch
      %23 = sbr.rel (0) target = $region13
    $region12: #{tpu_custom_call.1} parent=1 // pred_region
      _
    $region13: #{tpu_custom_call.1} parent=1 // pred_fallthru
      _
    // Predicated region
    $region14: #{tpu_custom_call.1} parent=1 // pred_check
      _
    $region15: #{tpu_custom_call.1} parent=1 // pred_check_branch
      %25 = sbr.rel (0) target = $region17
    $region16: #{tpu_custom_call.1} parent=1 // pred_region
      %26 = dma.done [#allocation3], 256
    $region17: #{tpu_custom_call.1} parent=1 // pred_fallthru
      _
    %v27 = vld [vmem:[#allocation2] sm:$0xff]
    %v28 = vld [vmem:[#allocation2 + $0x8] sm:$0xff]
    %29 = vrot.lane.b32.xlu0 %v27, 127
    %v30 = vpop.permute.xlu0 %29
    %31 = vrot.lane.b32.xlu0 %v28, 127
    %v32 = vpop.permute.xlu0 %31
    %v33 = vlaneseq
    %v34 = vand.u32 %v33, 127
    %vm35 = vcmp.lt.s32.totalorder %v34, 127
    %v36 = vsel %vm35, %v30, %v32
    %v37 = vsel %vm35, %v32, %v30
    %v38 = vsub.f32 %v27, %v36
    %v39 = vsub.f32 %v28, %v37
    %40 = vrot.lane.b32.xlu0 %v27, 112
    %v41 = vpop.permute.xlu0 %40
    %42 = vrot.lane.b32.xlu0 %v28, 112
    %v43 = vpop.permute.xlu0 %42
    %vm44 = vcmp.lt.s32.totalorder %v34, 112
    %v45 = vsel %vm44, %v41, %v43
    %v46 = vsel %vm44, %v43, %v41
    %v47 = vsub.f32 %v27, %v45
    %v48 = vsub.f32 %v28, %v46
    %v49 = vmul.f32 %v38, %v38
    %v50 = vmul.f32 %v39, %v39
    %v51 = vld [vmem:[%s1] sm:$0x3]
    %v53 = vlaneseq
    %v54 = vshrl.u32 %v53, 7
    %v55 = vsub.s32 0, %v54
    %v56 = vrot.slane %v51, %v55
    %v57 = vlaneseq
    %v58 = vshrl.u32 %v57, 7
    %v59 = vsub.s32 1, %v58
    %v60 = vrot.slane %v51, %v59
    %v63 = vmul.f32 %v49, %v56
    %v64 = vmul.f32 %v50, %v60
    %v65 = vmul.f32 %v47, %v47
    %v66 = vmul.f32 %v48, %v48
    %v67 = vld [vmem:[%s2] sm:$0x3]
    %v69 = vlaneseq
    %v70 = vshrl.u32 %v69, 7
    %v71 = vsub.s32 0, %v70
    %v72 = vrot.slane %v67, %v71
    %v73 = vlaneseq
    %v74 = vshrl.u32 %v73, 7
    %v75 = vsub.s32 1, %v74
    %v76 = vrot.slane %v67, %v75
    %v79 = vmul.f32 %v65, %v72
    %v80 = vmul.f32 %v66, %v76
    %v81 = vadd.f32 %v63, %v79
    %v82 = vadd.f32 %v64, %v80
    %v83 = vadd.f32 %v81, %v82
    %84 = vst [vmem:[#allocation5] sm:$0xff] %v83
    // Predicated region
    $region18: #{tpu_custom_call.1} parent=1 // pred_check
      _
    $region19: #{tpu_custom_call.1} parent=1 // pred_check_branch
      %86 = sbr.rel (0) target = $region21
    $region20: #{tpu_custom_call.1} parent=1 // pred_region
      %s88 = ssub.s32 128, 128
      %89 = vsyncadd [#allocation4], %s88
      %s91 = sshll.u32 [#allocation5], 4
      %s92 = int_to_ptr.vmem [resolvable:$true] %s91
      %94 = dma.vmem_to_hbm [thread:$0]  %s92, 128, %s3, [#allocation4]
    $region21: #{tpu_custom_call.1} parent=1 // pred_fallthru
      _
    // Predicated region
    $region22: #{tpu_custom_call.1} parent=1 // pred_check
      _
    $region23: #{tpu_custom_call.1} parent=1 // pred_check_branch
      %96 = sbr.rel (0) target = $region25
    $region24: #{tpu_custom_call.1} parent=1 // pred_region
      %97 = dma.done [#allocation4], 128
    $region25: #{tpu_custom_call.1} parent=1 // pred_fallthru
      _
    %98 = vsyncpa [#allocation3], 1
    %99 = vsyncpa [#allocation4], 1

</llo_original>
